<compile_context>
chip_gen: v6e
topology: v6e:2x2x1
jax: 0.10.0
libtpu: 0.0.40
codegen_flags: <defaults>
</compile_context>

<pallas_src>
import jax
import jax.numpy as jnp
from jax.experimental import pallas as pl
from jax.experimental.pallas import tpu as pltpu

IN_FEATURES = 8
H1, H2 = 32, 64
NUM_ACTIONS = 4
LANES = 128          # lane width / parameter-slab width
SLAB_ROWS = 128      # parameter-slab rows (8-row aligned sections, padded)

# Parameter layout inside the (128, 128) slab (weights in PyTorch (out, in) shape).
W1_R, W1_C = 0, 0      # w1: (32, 8)
B1_C = 8               # b1: rows 0:32,  col 8
W2_R, W2_C = 32, 0     # w2: (64, 32)
B2_C = 32              # b2: rows 32:96, col 32
W3_R, W3_C = 96, 0     # w3: (4, 64)
B3_C = 64              # b3: rows 96:100, col 64


def pg_mlp_kernel(xt_ref, p_ref, o_ref):
    # xt: (8, TB) — batch tile with batch on the lane axis.
    xt = xt_ref[...]

    # ---- Linear(8 -> 32) + ReLU :  (32, 8) @ (8, TB) ----
    w1 = p_ref[W1_R:W1_R + H1, W1_C:W1_C + IN_FEATURES]      # (32, 8)
    b1 = p_ref[W1_R:W1_R + H1, B1_C:B1_C + 1]                # (32, 1)
    h1 = jnp.dot(w1, xt, preferred_element_type=jnp.float32) + b1
    h1 = jnp.maximum(h1, 0.0)                                # (32, TB)

    # ---- Linear(32 -> 64) + ReLU : (64, 32) @ (32, TB) ----
    w2 = p_ref[W2_R:W2_R + H2, W2_C:W2_C + H1]               # (64, 32)
    b2 = p_ref[W2_R:W2_R + H2, B2_C:B2_C + 1]                # (64, 1)
    h2 = jnp.dot(w2, h1, preferred_element_type=jnp.float32) + b2
    h2 = jnp.maximum(h2, 0.0)                                # (64, TB)

    # ---- Linear(64 -> 4) : (4, 64) @ (64, TB) — no padding lanes, no mask ----
    w3 = p_ref[W3_R:W3_R + NUM_ACTIONS, W3_C:W3_C + H2]      # (4, 64)
    b3 = p_ref[W3_R:W3_R + NUM_ACTIONS, B3_C:B3_C + 1]       # (4, 1)
    logits = jnp.dot(w3, h2, preferred_element_type=jnp.float32) + b3  # (4, TB)

    # Numerically stable softmax over the 4 action sublanes (axis 0).
    m = jnp.max(logits, axis=0, keepdims=True)               # (1, TB)
    e = jnp.exp(logits - m)
    s = jnp.sum(e, axis=0, keepdims=True)                    # (1, TB)
    o_ref[...] = (e * pl.reciprocal(s)).astype(o_ref.dtype)  # exact reciprocal


def pack_params(params):
    """Pack PyTorch-shaped (w1,b1,w2,b2,w3,b3) into one (128, 128) f32 slab."""
    w1, b1, w2, b2, w3, b3 = params
    slab = jnp.zeros((SLAB_ROWS, LANES), jnp.float32)
    slab = slab.at[W1_R:W1_R + H1, W1_C:W1_C + IN_FEATURES].set(w1)
    slab = slab.at[W1_R:W1_R + H1, B1_C].set(b1.reshape(H1))
    slab = slab.at[W2_R:W2_R + H2, W2_C:W2_C + H1].set(w2)
    slab = slab.at[W2_R:W2_R + H2, B2_C].set(b2.reshape(H2))
    slab = slab.at[W3_R:W3_R + NUM_ACTIONS, W3_C:W3_C + H2].set(w3)
    slab = slab.at[W3_R:W3_R + NUM_ACTIONS, B3_C].set(b3.reshape(NUM_ACTIONS))
    return slab


def _ceil_to(n, m):
    return ((n + m - 1) // m) * m


def pg_forward(x, param_slab, *, block_b=1024):
    """Forward pass: x (B, 8) -> action probabilities (B, 4)."""
    B = x.shape[0]
    block_b = max(LANES, _ceil_to(block_b, LANES))

    # Adaptive tile: never pad a tiny (RL action-selection) batch up to a huge tile.
    eff = min(block_b, _ceil_to(B, LANES))
    # Keep >=2 grid steps when the batch spans more than one minimal tile so the
    # "parallel" batch axis can be sharded across both v7x TensorCores.
    if eff > LANES and _ceil_to(B, eff) // eff < 2:
        eff = max(LANES, _ceil_to(eff // 2, LANES))
    B_pad = _ceil_to(B, eff)

    # Lane-major (features x batch) input; padded batch columns produce finite
    # garbage probabilities that are sliced away below.
    x_t = x.astype(jnp.float32).T                     # (8, B)
    if B_pad != B:
        x_t = jnp.pad(x_t, ((0, 0), (0, B_pad - B)))  # (8, B_pad)

    out = pl.pallas_call(
        pg_mlp_kernel,
        out_shape=jax.ShapeDtypeStruct((NUM_ACTIONS, B_pad), jnp.float32),
        grid_spec=pltpu.PrefetchScalarGridSpec(
            num_scalar_prefetch=0,
            grid=(B_pad // eff,),
            in_specs=[
                pl.BlockSpec((IN_FEATURES, eff), lambda i: (0, i)),   # x tile
                pl.BlockSpec((SLAB_ROWS, LANES), lambda i: (0, 0)),   # params (resident)
            ],
            out_specs=pl.BlockSpec((NUM_ACTIONS, eff), lambda i: (0, i)),
        ),
        compiler_params=pltpu.CompilerParams(
            dimension_semantics=("parallel",)),
    )(x_t, param_slab)

    # Tiny (4, B) -> (B, 4) transpose; total probability payload is 16 B/row.
    return out[:, :B].T


def init_params(key):
    """Deterministic init mimicking nn.Linear default (uniform +/- 1/sqrt(fan_in)).

    Weights stored in PyTorch orientation (out, in); the kernel computes W @ x.T."""
    def linear(key, fan_in, fan_out):
        kw, kb = jax.random.split(key)
        bound = 1.0 / (fan_in ** 0.5)
        w = jax.random.uniform(kw, (fan_out, fan_in), jnp.float32, -bound, bound)
        b = jax.random.uniform(kb, (fan_out,), jnp.float32, -bound, bound)
        return w, b

    k1, k2, k3 = jax.random.split(key, 3)
    w1, b1 = linear(k1, IN_FEATURES, H1)
    w2, b2 = linear(k2, H1, H2)
    w3, b3 = linear(k3, H2, NUM_ACTIONS)
    return (w1, b1, w2, b2, w3, b3)


def pg_forward_ref(x, params):
    """Plain-JAX reference for correctness check (PyTorch semantics)."""
    w1, b1, w2, b2, w3, b3 = params
    h1 = jnp.maximum(x @ w1.T + b1, 0.0)
    h2 = jnp.maximum(h1 @ w2.T + b2, 0.0)
    logits = h2 @ w3.T + b3
    return jax.nn.softmax(logits, axis=-1)


if __name__ == "__main__":
    key = jax.random.PRNGKey(0)
    kparams, kx1, kx2 = jax.random.split(key, 3)
    params = init_params(kparams)
    slab = pack_params(params)

    # Batched case: adaptive tiling gives a 2-step "parallel" grid (v7x megacore path).
    B1 = 256
    x1 = jax.random.normal(kx1, (B1, IN_FEATURES), dtype=jnp.float32)
    probs1 = jax.block_until_ready(pg_forward(x1, slab))
    ref1 = pg_forward_ref(x1, params)
    assert probs1.shape == (B1, NUM_ACTIONS)
    assert jnp.allclose(probs1, ref1, atol=1e-5, rtol=1e-5)
    assert jnp.allclose(jnp.sum(probs1, axis=-1), 1.0, atol=1e-5)

    # Small / ragged batch (pads only to 128 rows, not to a full large tile).
    B2 = 5
    x2 = jax.random.normal(kx2, (B2, IN_FEATURES), dtype=jnp.float32)
    probs2 = jax.block_until_ready(pg_forward(x2, slab))
    ref2 = pg_forward_ref(x2, params)
    assert probs2.shape == (B2, NUM_ACTIONS)
    assert jnp.allclose(probs2, ref2, atol=1e-5, rtol=1e-5)
    assert jnp.allclose(jnp.sum(probs2, axis=-1), 1.0, atol=1e-5)

    print("KERNEL_OK")
</pallas_src>

<mosaic_0001>
module attributes {stable_mosaic.version = 11 : i64} {
  func.func @pg_mlp_kernel(%arg0: i32, %arg1: memref<8x128xf32, #tpu.memory_space<vmem>>, %arg2: memref<128x128xf32, #tpu.memory_space<vmem>>, %arg3: memref<4x128xf32, #tpu.memory_space<vmem>>) attributes {dimension_semantics = [#tpu.dimension_semantics<parallel>], iteration_bounds = array<i64: 2>, scalar_prefetch = 0 : i64, scratch_operands = 0 : i64, tpu.core_type = #tpu.core_type<tc>, window_params = [{transform_indices = @transform_0, window_bounds = array<i64: 8, 128>}, {pipeline_mode = #tpu.pipeline_mode<synchronous>, transform_indices = @transform_1, window_bounds = array<i64: 128, 128>}, {transform_indices = @transform_2, window_bounds = array<i64: 4, 128>}]} {
    %c0 = arith.constant 0 : index
    %c0_0 = arith.constant 0 : index
    %0 = vector.load %arg1[%c0, %c0_0] : memref<8x128xf32, #tpu.memory_space<vmem>>, vector<8x128xf32>
    %c0_1 = arith.constant 0 : index
    %c0_2 = arith.constant 0 : index
    %1 = vector.load %arg2[%c0_1, %c0_2] : memref<128x128xf32, #tpu.memory_space<vmem>>, vector<32x8xf32>
    %c0_3 = arith.constant 0 : index
    %c8 = arith.constant 8 : index
    %2 = vector.load %arg2[%c0_3, %c8] : memref<128x128xf32, #tpu.memory_space<vmem>>, vector<32x1xf32>
    %cst = arith.constant dense<0.000000e+00> : vector<32x128xf32>
    %3 = tpu.matmul %1, %0, %cst {dimension_numbers = #tpu.dot_dimension_numbers<[1], [0], [0], [1], [0, 0, 1, 1], [], []>} : vector<32x8xf32>, vector<8x128xf32>, vector<32x128xf32> -> vector<32x128xf32>
    %4 = vector.broadcast %2 : vector<32x1xf32> to vector<32x128xf32>
    %5 = arith.addf %3, %4 : vector<32x128xf32>
    %cst_4 = arith.constant 0.000000e+00 : f32
    %6 = vector.broadcast %cst_4 : f32 to vector<32x128xf32>
    %7 = arith.maximumf %5, %6 : vector<32x128xf32>
    %c32 = arith.constant 32 : index
    %c0_5 = arith.constant 0 : index
    %8 = vector.load %arg2[%c32, %c0_5] : memref<128x128xf32, #tpu.memory_space<vmem>>, vector<64x32xf32>
    %c32_6 = arith.constant 32 : index
    %c32_7 = arith.constant 32 : index
    %9 = vector.load %arg2[%c32_6, %c32_7] : memref<128x128xf32, #tpu.memory_space<vmem>>, vector<64x1xf32>
    %cst_8 = arith.constant dense<0.000000e+00> : vector<64x128xf32>
    %10 = tpu.matmul %8, %7, %cst_8 {dimension_numbers = #tpu.dot_dimension_numbers<[1], [0], [0], [1], [0, 0, 1, 1], [], []>} : vector<64x32xf32>, vector<32x128xf32>, vector<64x128xf32> -> vector<64x128xf32>
    %11 = vector.broadcast %9 : vector<64x1xf32> to vector<64x128xf32>
    %12 = arith.addf %10, %11 : vector<64x128xf32>
    %cst_9 = arith.constant 0.000000e+00 : f32
    %13 = vector.broadcast %cst_9 : f32 to vector<64x128xf32>
    %14 = arith.maximumf %12, %13 : vector<64x128xf32>
    %c96 = arith.constant 96 : index
    %c0_10 = arith.constant 0 : index
    %15 = vector.load %arg2[%c96, %c0_10] : memref<128x128xf32, #tpu.memory_space<vmem>>, vector<4x64xf32>
    %c96_11 = arith.constant 96 : index
    %c64 = arith.constant 64 : index
    %16 = vector.load %arg2[%c96_11, %c64] : memref<128x128xf32, #tpu.memory_space<vmem>>, vector<4x1xf32>
    %cst_12 = arith.constant dense<0.000000e+00> : vector<4x128xf32>
    %17 = tpu.matmul %15, %14, %cst_12 {dimension_numbers = #tpu.dot_dimension_numbers<[1], [0], [0], [1], [0, 0, 1, 1], [], []>} : vector<4x64xf32>, vector<64x128xf32>, vector<4x128xf32> -> vector<4x128xf32>
    %18 = vector.broadcast %16 : vector<4x1xf32> to vector<4x128xf32>
    %19 = arith.addf %17, %18 : vector<4x128xf32>
    %cst_13 = arith.constant dense<0xFF800000> : vector<128xf32>
    %20 = vector.multi_reduction <maximumf>, %19, %cst_13 [0] : vector<4x128xf32> to vector<128xf32>
    %21 = vector.shape_cast %20 : vector<128xf32> to vector<1x128xf32>
    %22 = vector.broadcast %21 : vector<1x128xf32> to vector<4x128xf32>
    %23 = arith.subf %19, %22 : vector<4x128xf32>
    %24 = math.exp %23 : vector<4x128xf32>
    %cst_14 = arith.constant dense<0.000000e+00> : vector<128xf32>
    %25 = vector.multi_reduction <add>, %24, %cst_14 [0] : vector<4x128xf32> to vector<128xf32>
    %26 = vector.shape_cast %25 : vector<128xf32> to vector<1x128xf32>
    %27 = tpu.reciprocal %26 : vector<1x128xf32> -> vector<1x128xf32>
    %28 = vector.broadcast %27 : vector<1x128xf32> to vector<4x128xf32>
    %29 = arith.mulf %24, %28 : vector<4x128xf32>
    %c0_15 = arith.constant 0 : index
    %c0_16 = arith.constant 0 : index
    %30 = vector.load %arg3[%c0_15, %c0_16] : memref<4x128xf32, #tpu.memory_space<vmem>>, vector<4x128xf32>
    tpu.vector_store %arg3[%c0_15, %c0_16], %29 {strides = array<i32>} : memref<4x128xf32, #tpu.memory_space<vmem>>, vector<4x128xf32>,
    return
  }
  func.func @transform_0(%arg0: i32) -> (i32, i32) {
    %c0_i32 = arith.constant 0 : i32
    %c0_i32_0 = arith.constant 0 : i32
    return %c0_i32, %arg0 : i32, i32
  }
  func.func @transform_1(%arg0: i32) -> (i32, i32) {
    %c0_i32 = arith.constant 0 : i32
    %c0_i32_0 = arith.constant 0 : i32
    %c0_i32_1 = arith.constant 0 : i32
    return %c0_i32, %c0_i32_0 : i32, i32
  }
  func.func @transform_2(%arg0: i32) -> (i32, i32) {
    %c0_i32 = arith.constant 0 : i32
    %c0_i32_0 = arith.constant 0 : i32
    return %c0_i32, %arg0 : i32, i32
  }
}

</mosaic_0001>

<llo_original>
// kernel: tpu_custom_call.1
$region0: #{tpu_custom_call.1}
  #allocation0 [shape = 'u32[]', space=smem, size = 0x4, offset = 0x4, fixed_abs, tag = 'smem constant byte address 0x4 - core index']
  #allocation1 [shape = 'u32[144,128]{1,0:T(1,128)}', space=vmem, size = 0x12000, scoped, tag = 'internal scratch']
  %s0 = inlined_call_operand.hbm [shape: f32[8,256], index: 0, kind: input, shape index: {}]
  %s1 = inlined_call_operand.hbm [shape: f32[128,128], index: 1, kind: input, shape index: {}]
  %s2 = inlined_call_operand.hbm [shape: f32[4,256], index: 2, kind: output, shape index: {}]
  %s3 = sld [smem:[#allocation0]]
  $region49: #{tpu_custom_call.1} parent=0
    _
  %s5 = ssub.s32 1, %s3
  %s6 = scalar_select 0, %s5, %s3
  $region1: #{tpu_custom_call.1} parent=0
    #allocation2 [shape = 'u8[8192]{0}', space=vmem, size = 0x2000, scoped, tag = 'input window, operand 0']
    #allocation3 [shape = 's32[2]{0}', space=sflag, size = 0x8, scoped, tag = 'scoped memory for tpu_custom_call.1']
    #allocation4 [shape = 's32[2]{0}', space=sflag, size = 0x8, scoped, tag = 'scoped memory for tpu_custom_call.1']
    #allocation5 [shape = 'u8[65536]{0}', space=vmem, size = 0x10000, scoped, tag = 'input window, operand 1, single buffered']
    #allocation6 [shape = 's32[1]{0}', space=sflag, size = 0x4, scoped, tag = 'scoped memory for tpu_custom_call.1']
    #allocation7 [shape = 'u8[4096]{0}', space=vmem, size = 0x1000, scoped, tag = 'output window, operand 0']
    %7 = vsyncpa [#allocation3], 0
    %s8 = scalar_lea.sflag [#allocation3], 1
    %9 = vsyncpa %s8, 0
    %10 = vsyncpa [#allocation6], 0
    %11 = vsyncpa [#allocation4], 0
    %s12 = scalar_lea.sflag [#allocation4], 1
    %13 = vsyncpa %s12, 0
    loop: start=0, step=1, limit=4
    $region2: #{tpu_custom_call.1} parent=1 // loop_pre_header
      _
    $region3: #{tpu_custom_call.1} parent=1 // loop_header
      %s15 = sphi 0, %s19
      %p16 = scmp.ge.s32.totalorder %s15, 4
      %s25 = sphi 0, %s27
      %s28 = sphi 0, %s25
      %s29 = sphi 0, %s28
      %s45 = sphi 0, %s29
      %s49 = sphi 0, %s49
      %s51 = sphi 0, %s49
      %s52 = sphi 0, %s51
      %s66 = sphi 0, %s52
      %s72 = sphi 0, %s74
      %s75 = sphi 0, %s72
      %s76 = sphi 0, %s75
      %s92 = sphi 0, %s76
    $region4: #{tpu_custom_call.1} parent=1 // loop_header_branch
      %18 = sbr.rel (%p16) target = $region8
    $region5: #{tpu_custom_call.1} parent=1 // loop_body
      %s20 = ssub.s32 %s15, 1
      %s21 = ssub.s32 %s15, 2
      %s22 = sadd.s32 %s15, 1
      %s23 = ssub.s32 %s15, %s22
      %p24 = scmp.eq.s32.totalorder %s23, 0
      %s26 = sadd.s32 %s25, 1
      %s27 = scalar_select %p24, %s25, %s26
      %p30 = pneg %p24
      %p31 = scmp.eq.s32.totalorder %s15, 1
      %p32 = por %p30, %p31
      %p33 = scmp.ne.s32.totalorder %s25, %s28
      %p34 = scmp.eq.s32.totalorder %s15, 0
      %p35 = por %p33, %p34
      %p36 = scmp.ne.s32.totalorder %s25, %s28
      %p37 = scmp.eq.s32.totalorder %s20, 1
      %p38 = por %p36, %p37
      %p39 = scmp.ne.s32.totalorder %s28, %s29
      %p40 = scmp.eq.s32.totalorder %s20, 0
      %p41 = por %p39, %p40
      %p42 = scmp.ne.s32.totalorder %s28, %s29
      %p43 = scmp.eq.s32.totalorder %s21, 1
      %p44 = por %p42, %p43
      %p46 = scmp.ne.s32.totalorder %s29, %s45
      %p47 = scmp.eq.s32.totalorder %s21, 0
      %p48 = por %p46, %p47
      %s50 = sadd.s32 %s49, 1
      %p53 = scmp.eq.s32.totalorder %s15, 1
      %p54 = scmp.ne.s32.totalorder %s49, %s51
      %p55 = scmp.eq.s32.totalorder %s15, 0
      %p56 = por %p54, %p55
      %p57 = scmp.ne.s32.totalorder %s49, %s51
      %p58 = scmp.eq.s32.totalorder %s20, 1
      %p59 = por %p57, %p58
      %p60 = scmp.ne.s32.totalorder %s51, %s52
      %p61 = scmp.eq.s32.totalorder %s20, 0
      %p62 = por %p60, %p61
      %p63 = scmp.ne.s32.totalorder %s51, %s52
      %p64 = scmp.eq.s32.totalorder %s21, 1
      %p65 = por %p63, %p64
      %p67 = scmp.ne.s32.totalorder %s52, %s66
      %p68 = scmp.eq.s32.totalorder %s21, 0
      %p69 = por %p67, %p68
      %s70 = ssub.s32 %s15, %s22
      %p71 = scmp.eq.s32.totalorder %s70, 0
      %s73 = sadd.s32 %s72, 1
      %s74 = scalar_select %p71, %s72, %s73
      %p77 = pneg %p71
      %p78 = scmp.eq.s32.totalorder %s15, 1
      %p79 = por %p77, %p78
      %p80 = scmp.ne.s32.totalorder %s72, %s75
      %p81 = scmp.eq.s32.totalorder %s15, 0
      %p82 = por %p80, %p81
      %p83 = scmp.ne.s32.totalorder %s72, %s75
      %p84 = scmp.eq.s32.totalorder %s20, 1
      %p85 = por %p83, %p84
      %p86 = scmp.ne.s32.totalorder %s75, %s76
      %p87 = scmp.eq.s32.totalorder %s20, 0
      %p88 = por %p86, %p87
      %p89 = scmp.ne.s32.totalorder %s75, %s76
      %p90 = scmp.eq.s32.totalorder %s21, 1
      %p91 = por %p89, %p90
      %p93 = scmp.ne.s32.totalorder %s76, %s92
      %p94 = scmp.eq.s32.totalorder %s21, 0
      %p95 = por %p93, %p94
      %p96 = scmp.le.s32.totalorder 1, %s15
      %p97 = scmp.lt.s32.totalorder %s15, 3
      %p98 = pnand %p96, %p97
      %p99 = pneg %p98
      // Predicated region
      $region9: #{tpu_custom_call.1} parent=5 // pred_check
        _
      $region10: #{tpu_custom_call.1} parent=5 // pred_check_branch
        %101 = sbr.rel (%p98) target = $region12
      $region11: #{tpu_custom_call.1} parent=5 // pred_region
        %s102 = ssub.s32 %s15, 1
        // Predicated region
        $region13: #{tpu_custom_call.1} parent=11 // pred_check
          %p103 = pneg %p62
        $region14: #{tpu_custom_call.1} parent=11 // pred_check_branch
          %105 = sbr.rel (%p103) target = $region16
        $region15: #{tpu_custom_call.1} parent=11 // pred_region
          %s107 = ssub.s32 2048, 2048
          %108 = vsyncadd [#allocation6], %s107
          %s109 = sshll.u32 [#allocation5], 4
          %s110 = int_to_ptr.vmem [resolvable:$true] %s109
          %115 = dma.hbm_to_vmem [thread:$0]  %s1, 2048, %s110, [#allocation6], 128, 128, 8
        $region16: #{tpu_custom_call.1} parent=11 // pred_fallthru
          _
      $region12: #{tpu_custom_call.1} parent=5 // pred_fallthru
        _
      %p116 = scmp.lt.s32.totalorder %s15, 2
      // Predicated region
      $region17: #{tpu_custom_call.1} parent=5 // pred_check
        %p117 = pneg %p116
      $region18: #{tpu_custom_call.1} parent=5 // pred_check_branch
        %119 = sbr.rel (%p117) target = $region20
      $region19: #{tpu_custom_call.1} parent=5 // pred_region
        // Predicated region
        $region21: #{tpu_custom_call.1} parent=19 // pred_check
          %p120 = pneg %p35
        $region22: #{tpu_custom_call.1} parent=19 // pred_check_branch
          %122 = sbr.rel (%p120) target = $region24
        $region23: #{tpu_custom_call.1} parent=19 // pred_region
          %s123 = sand.u32 %s25, 1
          %s124 = scalar_lea.sflag [#allocation3], %s123
          %s125 = sand.u32 %s25, 1
          %s126 = smul.addr %s125, 8
          %s127 = scalar_lea.vmem [#allocation2], %s126
          %s129 = ssub.s32 128, 128
          %130 = vsyncadd %s124, %s129
          %s131 = smul.addr %s15, 128
          %s132 = scalar_lea.hbm %s0, %s131
          %s134 = sshll.u32 %s127, 4
          %s135 = int_to_ptr.vmem [resolvable:$true] %s134
          %137 = dma.hbm_to_vmem [thread:$0]  %s132, 128, %s135, %s124
        $region24: #{tpu_custom_call.1} parent=19 // pred_fallthru
          _
      $region20: #{tpu_custom_call.1} parent=5 // pred_fallthru
        _
      %p138 = scmp.le.s32.totalorder 1, %s15
      %p139 = scmp.lt.s32.totalorder %s15, 3
      %p140 = pnand %p138, %p139
      %p141 = pneg %p140
      // Predicated region
      $region25: #{tpu_custom_call.1} parent=5 // pred_check
        _
      $region26: #{tpu_custom_call.1} parent=5 // pred_check_branch
        %143 = sbr.rel (%p140) target = $region28
      $region27: #{tpu_custom_call.1} parent=5 // pred_region
        %s144 = ssub.s32 %s15, 1
        %s145 = sand.u32 %s28, 1
        %s146 = scalar_lea.sflag [#allocation3], %s145
        %s147 = sand.u32 %s28, 1
        %s148 = smul.addr %s147, 8
        %s149 = scalar_lea.vmem [#allocation2], %s148
        // Predicated region
        $region29: #{tpu_custom_call.1} parent=27 // pred_check
          %p150 = pneg %p41
        $region30: #{tpu_custom_call.1} parent=27 // pred_check_branch
          %152 = sbr.rel (%p150) target = $region32
        $region31: #{tpu_custom_call.1} parent=27 // pred_region
          %153 = dma.done %s146, 128
        $region32: #{tpu_custom_call.1} parent=27 // pred_fallthru
          _
        // Predicated region
        $region33: #{tpu_custom_call.1} parent=27 // pred_check
          %p154 = pneg %p62
        $region34: #{tpu_custom_call.1} parent=27 // pred_check_branch
          %156 = sbr.rel (%p154) target = $region36
        $region35: #{tpu_custom_call.1} parent=27 // pred_region
          %157 = dma.done [#allocation6], 2048
        $region36: #{tpu_custom_call.1} parent=27 // pred_fallthru
          _
        %s158 = sand.u32 %s28, 1
        %s159 = scalar_lea.sflag [#allocation3], %s158
        %s160 = sand.u32 %s28, 1
        %s161 = smul.addr %s160, 8
        %s162 = scalar_lea.vmem [#allocation2], %s161
        %p163 = pneg %p41
        %p164 = pneg %p38
        %p165 = pneg %p62
        %p166 = pneg %p59
        %p167 = pneg %p88
        %p168 = pneg %p85
        %s169 = sand.u32 %s75, 1
        %s170 = scalar_lea.sflag [#allocation4], %s169
        %s171 = sand.u32 %s75, 1
        %s172 = smul.addr %s171, 4
        %s173 = scalar_lea.vmem [#allocation7], %s172
        %v174 = vld [vmem:[%s149] sm:$0xff]
        %v175 = vld [vmem:[#allocation5] sm:$0xff]
        %v176 = vld [vmem:[#allocation5 + $0x8] sm:$0xff]
        %v177 = vld [vmem:[#allocation5 + $0x10] sm:$0xff]
        %v178 = vld [vmem:[#allocation5 + $0x18] sm:$0xff]
        %180 = vset.pattern.permute.xlu0 8
        %181 = vperm.xlu0 %180, %v175
        %v182 = vpop.permute.xlu0 %181
        %185 = vset.pattern.permute.xlu0 8
        %186 = vperm.xlu0 %185, %v176
        %v187 = vpop.permute.xlu0 %186
        %190 = vset.pattern.permute.xlu0 8
        %191 = vperm.xlu0 %190, %v177
        %v192 = vpop.permute.xlu0 %191
        %195 = vset.pattern.permute.xlu0 8
        %196 = vperm.xlu0 %195, %v178
        %v197 = vpop.permute.xlu0 %196
        %vm199 = vcmask 64512
        %v200 = vsel %vm199, %v175, 0
        %v202 = vsel %vm199, %v176, 0
        %v204 = vsel %vm199, %v177, 0
        %v206 = vsel %vm199, %v178, 0
        %208 = vmatprep.subr.mxu0 0.0
        %209 = vmatpush1.msra.mxu0 0.0
        %210 = vmatprep.subr.mxu0 0.0
        %211 = vmatpush1.msra.mxu0 0.0
        %212 = vmatprep.subr.mxu0 0.0
        %213 = vmatpush1.msra.mxu0 0.0
        %214 = vmatprep.subr.mxu0 0.0
        %215 = vmatpush1.msra.mxu0 0.0
        %216 = vmatprep.subr.mxu0 0.0
        %217 = vmatpush1.msra.mxu0 0.0
        %218 = vmatprep.subr.mxu0 0.0
        %219 = vmatpush1.msra.mxu0 0.0
        %220 = vmatprep.subr.mxu0 0.0
        %221 = vmatpush1.msra.mxu0 0.0
        %222 = vmatprep.subr.mxu0 0.0
        %223 = vmatpush1.msra.mxu0 0.0
        %224 = vmatprep.subr.mxu0 0.0
        %225 = vmatpush1.msra.mxu0 0.0
        %226 = vmatprep.subr.mxu0 0.0
        %227 = vmatpush1.msra.mxu0 0.0
        %228 = vmatprep.subr.mxu0 0.0
        %229 = vmatpush1.msra.mxu0 0.0
        %230 = vmatprep.subr.mxu0 0.0
        %231 = vmatpush1.msra.mxu0 0.0
        %232 = vmatprep.subr.mxu0 0.0
        %233 = vmatpush1.msra.mxu0 0.0
        %234 = vmatprep.subr.mxu0 0.0
        %235 = vmatpush1.msra.mxu0 0.0
        %236 = vmatprep.subr.mxu0 0.0
        %237 = vmatpush1.msra.mxu0 0.0
        %238 = vmatprep.subr.mxu0 0.0
        %239 = vmatpush1.msra.mxu0 %v174
        %240 = vmatprep.subr.mxu0 0.0
        %241 = vmatpush2.msra.mxu0 0.0
        %242 = vmatprep.subr.mxu0 0.0
        %243 = vmatpush2.msra.mxu0 0.0
        %244 = vmatprep.subr.mxu0 0.0
        %245 = vmatpush2.msra.mxu0 0.0
        %246 = vmatprep.subr.mxu0 0.0
        %247 = vmatpush2.msra.mxu0 0.0
        %248 = vmatprep.subr.mxu0 0.0
        %249 = vmatpush2.msra.mxu0 0.0
        %250 = vmatprep.subr.mxu0 0.0
        %251 = vmatpush2.msra.mxu0 0.0
        %252 = vmatprep.subr.mxu0 0.0
        %253 = vmatpush2.msra.mxu0 0.0
        %254 = vmatprep.subr.mxu0 0.0
        %255 = vmatpush2.msra.mxu0 0.0
        %256 = vmatprep.subr.mxu0 0.0
        %257 = vmatpush2.msra.mxu0 0.0
        %258 = vmatprep.subr.mxu0 0.0
        %259 = vmatpush2.msra.mxu0 0.0
        %260 = vmatprep.subr.mxu0 0.0
        %261 = vmatpush2.msra.mxu0 0.0
        %262 = vmatprep.subr.mxu0 0.0
        %263 = vmatpush2.msra.mxu0 0.0
        %264 = vmatprep.subr.mxu0 0.0
        %265 = vmatpush2.msra.mxu0 0.0
        %266 = vmatprep.subr.mxu0 0.0
        %267 = vmatpush2.msra.mxu0 0.0
        %268 = vmatprep.subr.mxu0 0.0
        %269 = vmatpush2.msra.mxu0 0.0
        %270 = vmatprep.subr.mxu0 0.0
        %271 = vmatpush2.msra.mxu0 0.0
        %272 = vmatprep.mubr.f32.mxu0 0.0
        %273 = vmatmul.mubr.f32.gmra.mxu0 %v200
        %v274 = vpop.f32.mrf.mxu0
        %v275 = vadd.f32 %v182, %v274
        %v276 = vpop.f32.mrf.mxu0
        %277 = vmatprep.mubr.f32.mxu0 0.0
        %278 = vmatmul.mubr.f32.gmra.mxu0 %v202
        %v279 = vpop.f32.mrf.mxu0
        %v280 = vadd.f32 %v187, %v279
        %v281 = vpop.f32.mrf.mxu0
        %282 = vmatprep.mubr.f32.mxu0 0.0
        %283 = vmatmul.mubr.f32.gmra.mxu0 %v204
        %v284 = vpop.f32.mrf.mxu0
        %v285 = vadd.f32 %v192, %v284
        %v286 = vpop.f32.mrf.mxu0
        %287 = vmatprep.mubr.f32.mxu0 0.0
        %288 = vmatmul.mubr.f32.gmra.mxu0 %v206
        %v289 = vpop.f32.mrf.mxu0
        %v290 = vadd.f32 %v197, %v289
        %v291 = vpop.f32.mrf.mxu0
        %292 = vdwg.mxu0
        %v293 = vmax.f32 %v275, 0.0
        %v294 = vmax.f32 %v280, 0.0
        %v295 = vmax.f32 %v285, 0.0
        %v296 = vmax.f32 %v290, 0.0
        %v297 = vld [vmem:[#allocation5 + $0x20] sm:$0xff]
        %v298 = vld [vmem:[#allocation5 + $0x28] sm:$0xff]
        %v299 = vld [vmem:[#allocation5 + $0x30] sm:$0xff]
        %v300 = vld [vmem:[#allocation5 + $0x38] sm:$0xff]
        %v301 = vld [vmem:[#allocation5 + $0x40] sm:$0xff]
        %v302 = vld [vmem:[#allocation5 + $0x48] sm:$0xff]
        %v303 = vld [vmem:[#allocation5 + $0x50] sm:$0xff]
        %v304 = vld [vmem:[#allocation5 + $0x58] sm:$0xff]
        %306 = vset.pattern.permute.xlu0 32
        %307 = vperm.xlu0 %306, %v297
        %v308 = vpop.permute.xlu0 %307
        %311 = vset.pattern.permute.xlu0 32
        %312 = vperm.xlu0 %311, %v298
        %v313 = vpop.permute.xlu0 %312
        %316 = vset.pattern.permute.xlu0 32
        %317 = vperm.xlu0 %316, %v299
        %v318 = vpop.permute.xlu0 %317
        %321 = vset.pattern.permute.xlu0 32
        %322 = vperm.xlu0 %321, %v300
        %v323 = vpop.permute.xlu0 %322
        %326 = vset.pattern.permute.xlu0 32
        %327 = vperm.xlu0 %326, %v301
        %v328 = vpop.permute.xlu0 %327
        %331 = vset.pattern.permute.xlu0 32
        %332 = vperm.xlu0 %331, %v302
        %v333 = vpop.permute.xlu0 %332
        %336 = vset.pattern.permute.xlu0 32
        %337 = vperm.xlu0 %336, %v303
        %v338 = vpop.permute.xlu0 %337
        %341 = vset.pattern.permute.xlu0 32
        %342 = vperm.xlu0 %341, %v304
        %v343 = vpop.permute.xlu0 %342
        %vm345 = vcmask 261120
        %v346 = vsel %vm345, %v297, 0
        %v348 = vsel %vm345, %v298, 0
        %v350 = vsel %vm345, %v299, 0
        %v352 = vsel %vm345, %v300, 0
        %v354 = vsel %vm345, %v301, 0
        %v356 = vsel %vm345, %v302, 0
        %v358 = vsel %vm345, %v303, 0
        %v360 = vsel %vm345, %v304, 0
        %362 = vmatprep.subr.mxu0 0.0
        %363 = vmatpush1.msra.mxu0 0.0
        %364 = vmatprep.subr.mxu0 0.0
        %365 = vmatpush1.msra.mxu0 0.0
        %366 = vmatprep.subr.mxu0 0.0
        %367 = vmatpush1.msra.mxu0 0.0
        %368 = vmatprep.subr.mxu0 0.0
        %369 = vmatpush1.msra.mxu0 0.0
        %370 = vmatprep.subr.mxu0 0.0
        %371 = vmatpush1.msra.mxu0 0.0
        %372 = vmatprep.subr.mxu0 0.0
        %373 = vmatpush1.msra.mxu0 0.0
        %374 = vmatprep.subr.mxu0 0.0
        %375 = vmatpush1.msra.mxu0 0.0
        %376 = vmatprep.subr.mxu0 0.0
        %377 = vmatpush1.msra.mxu0 0.0
        %378 = vmatprep.subr.mxu0 0.0
        %379 = vmatpush1.msra.mxu0 0.0
        %380 = vmatprep.subr.mxu0 0.0
        %381 = vmatpush1.msra.mxu0 0.0
        %382 = vmatprep.subr.mxu0 0.0
        %383 = vmatpush1.msra.mxu0 0.0
        %384 = vmatprep.subr.mxu0 0.0
        %385 = vmatpush1.msra.mxu0 0.0
        %386 = vmatprep.subr.mxu0 0.0
        %387 = vmatpush1.msra.mxu0 %v296
        %388 = vmatprep.subr.mxu0 0.0
        %389 = vmatpush1.msra.mxu0 %v295
        %390 = vmatprep.subr.mxu0 0.0
        %391 = vmatpush1.msra.mxu0 %v294
        %392 = vmatprep.subr.mxu0 0.0
        %393 = vmatpush1.msra.mxu0 %v293
        %394 = vmatprep.subr.mxu0 0.0
        %395 = vmatpush2.msra.mxu0 0.0
        %396 = vmatprep.subr.mxu0 0.0
        %397 = vmatpush2.msra.mxu0 0.0
        %398 = vmatprep.subr.mxu0 0.0
        %399 = vmatpush2.msra.mxu0 0.0
        %400 = vmatprep.subr.mxu0 0.0
        %401 = vmatpush2.msra.mxu0 0.0
        %402 = vmatprep.subr.mxu0 0.0
        %403 = vmatpush2.msra.mxu0 0.0
        %404 = vmatprep.subr.mxu0 0.0
        %405 = vmatpush2.msra.mxu0 0.0
        %406 = vmatprep.subr.mxu0 0.0
        %407 = vmatpush2.msra.mxu0 0.0
        %408 = vmatprep.subr.mxu0 0.0
        %409 = vmatpush2.msra.mxu0 0.0
        %410 = vmatprep.subr.mxu0 0.0
        %411 = vmatpush2.msra.mxu0 0.0
        %412 = vmatprep.subr.mxu0 0.0
        %413 = vmatpush2.msra.mxu0 0.0
        %414 = vmatprep.subr.mxu0 0.0
        %415 = vmatpush2.msra.mxu0 0.0
        %416 = vmatprep.subr.mxu0 0.0
        %417 = vmatpush2.msra.mxu0 0.0
        %418 = vmatprep.subr.mxu0 0.0
        %419 = vmatpush2.msra.mxu0 0.0
        %420 = vmatprep.subr.mxu0 0.0
        %421 = vmatpush2.msra.mxu0 0.0
        %422 = vmatprep.subr.mxu0 0.0
        %423 = vmatpush2.msra.mxu0 0.0
        %424 = vmatprep.subr.mxu0 0.0
        %425 = vmatpush2.msra.mxu0 0.0
        %426 = vmatprep.mubr.f32.mxu0 0.0
        %427 = vmatmul.mubr.f32.gmra.mxu0 %v346
        %v428 = vpop.f32.mrf.mxu0
        %v429 = vadd.f32 %v308, %v428
        %v430 = vpop.f32.mrf.mxu0
        %431 = vmatprep.mubr.f32.mxu0 0.0
        %432 = vmatmul.mubr.f32.gmra.mxu0 %v348
        %v433 = vpop.f32.mrf.mxu0
        %v434 = vadd.f32 %v313, %v433
        %v435 = vpop.f32.mrf.mxu0
        %436 = vmatprep.mubr.f32.mxu0 0.0
        %437 = vmatmul.mubr.f32.gmra.mxu0 %v350
        %v438 = vpop.f32.mrf.mxu0
        %v439 = vadd.f32 %v318, %v438
        %v440 = vpop.f32.mrf.mxu0
        %441 = vmatprep.mubr.f32.mxu0 0.0
        %442 = vmatmul.mubr.f32.gmra.mxu0 %v352
        %v443 = vpop.f32.mrf.mxu0
        %v444 = vadd.f32 %v323, %v443
        %v445 = vpop.f32.mrf.mxu0
        %446 = vmatprep.mubr.f32.mxu0 0.0
        %447 = vmatmul.mubr.f32.gmra.mxu0 %v354
        %v448 = vpop.f32.mrf.mxu0
        %v449 = vadd.f32 %v328, %v448
        %v450 = vpop.f32.mrf.mxu0
        %451 = vmatprep.mubr.f32.mxu0 0.0
        %452 = vmatmul.mubr.f32.gmra.mxu0 %v356
        %v453 = vpop.f32.mrf.mxu0
        %v454 = vadd.f32 %v333, %v453
        %v455 = vpop.f32.mrf.mxu0
        %456 = vmatprep.mubr.f32.mxu0 0.0
        %457 = vmatmul.mubr.f32.gmra.mxu0 %v358
        %v458 = vpop.f32.mrf.mxu0
        %v459 = vadd.f32 %v338, %v458
        %v460 = vpop.f32.mrf.mxu0
        %461 = vmatprep.mubr.f32.mxu0 0.0
        %462 = vmatmul.mubr.f32.gmra.mxu0 %v360
        %v463 = vpop.f32.mrf.mxu0
        %v464 = vadd.f32 %v343, %v463
        %v465 = vpop.f32.mrf.mxu0
        %466 = vdwg.mxu0
        %v467 = vmax.f32 %v429, 0.0
        %v468 = vmax.f32 %v434, 0.0
        %v469 = vmax.f32 %v439, 0.0
        %v470 = vmax.f32 %v444, 0.0
        %v471 = vmax.f32 %v449, 0.0
        %v472 = vmax.f32 %v454, 0.0
        %v473 = vmax.f32 %v459, 0.0
        %v474 = vmax.f32 %v464, 0.0
        %v475 = vld [vmem:[#allocation5 + $0x60] sm:$0xf]
        %477 = vset.pattern.permute.xlu0 64
        %478 = vperm.xlu0 %477, %v475
        %v479 = vpop.permute.xlu0 %478
        %vm481 = vcmask 523264
        %v482 = vsel %vm481, %v475, 0
        %484 = vmatprep.subr.mxu0 0.0
        %485 = vmatpush1.msra.mxu0 0.0
        %486 = vmatprep.subr.mxu0 0.0
        %487 = vmatpush1.msra.mxu0 0.0
        %488 = vmatprep.subr.mxu0 0.0
        %489 = vmatpush1.msra.mxu0 0.0
        %490 = vmatprep.subr.mxu0 0.0
        %491 = vmatpush1.msra.mxu0 0.0
        %492 = vmatprep.subr.mxu0 0.0
        %493 = vmatpush1.msra.mxu0 0.0
        %494 = vmatprep.subr.mxu0 0.0
        %495 = vmatpush1.msra.mxu0 0.0
        %496 = vmatprep.subr.mxu0 0.0
        %497 = vmatpush1.msra.mxu0 0.0
        %498 = vmatprep.subr.mxu0 0.0
        %499 = vmatpush1.msra.mxu0 0.0
        %500 = vmatprep.subr.mxu0 0.0
        %501 = vmatpush1.msra.mxu0 %v474
        %502 = vmatprep.subr.mxu0 0.0
        %503 = vmatpush1.msra.mxu0 %v473
        %504 = vmatprep.subr.mxu0 0.0
        %505 = vmatpush1.msra.mxu0 %v472
        %506 = vmatprep.subr.mxu0 0.0
        %507 = vmatpush1.msra.mxu0 %v471
        %508 = vmatprep.subr.mxu0 0.0
        %509 = vmatpush1.msra.mxu0 %v470
        %510 = vmatprep.subr.mxu0 0.0
        %511 = vmatpush1.msra.mxu0 %v469
        %512 = vmatprep.subr.mxu0 0.0
        %513 = vmatpush1.msra.mxu0 %v468
        %514 = vmatprep.subr.mxu0 0.0
        %515 = vmatpush1.msra.mxu0 %v467
        %516 = vmatprep.subr.mxu0 0.0
        %517 = vmatpush2.msra.mxu0 0.0
        %518 = vmatprep.subr.mxu0 0.0
        %519 = vmatpush2.msra.mxu0 0.0
        %520 = vmatprep.subr.mxu0 0.0
        %521 = vmatpush2.msra.mxu0 0.0
        %522 = vmatprep.subr.mxu0 0.0
        %523 = vmatpush2.msra.mxu0 0.0
        %524 = vmatprep.subr.mxu0 0.0
        %525 = vmatpush2.msra.mxu0 0.0
        %526 = vmatprep.subr.mxu0 0.0
        %527 = vmatpush2.msra.mxu0 0.0
        %528 = vmatprep.subr.mxu0 0.0
        %529 = vmatpush2.msra.mxu0 0.0
        %530 = vmatprep.subr.mxu0 0.0
        %531 = vmatpush2.msra.mxu0 0.0
        %532 = vmatprep.subr.mxu0 0.0
        %533 = vmatpush2.msra.mxu0 0.0
        %534 = vmatprep.subr.mxu0 0.0
        %535 = vmatpush2.msra.mxu0 0.0
        %536 = vmatprep.subr.mxu0 0.0
        %537 = vmatpush2.msra.mxu0 0.0
        %538 = vmatprep.subr.mxu0 0.0
        %539 = vmatpush2.msra.mxu0 0.0
        %540 = vmatprep.subr.mxu0 0.0
        %541 = vmatpush2.msra.mxu0 0.0
        %542 = vmatprep.subr.mxu0 0.0
        %543 = vmatpush2.msra.mxu0 0.0
        %544 = vmatprep.subr.mxu0 0.0
        %545 = vmatpush2.msra.mxu0 0.0
        %546 = vmatprep.subr.mxu0 0.0
        %547 = vmatpush2.msra.mxu0 0.0
        %548 = vmatprep.mubr.f32.mxu0 0.0
        %549 = vmatmul.mubr.f32.gmra.mxu0 %v482
        %v550 = vpop.f32.mrf.mxu0
        %v551 = vadd.f32 %v479, %v550
        %v552 = vpop.f32.mrf.mxu0
        %553 = vdwg.mxu0
        %vm554 = vcmask 1043456
        %v555 = vsel %vm554, %v551, -inf
        %v556 = vrot.slane %v555, 4
        %v557 = vmax.f32 %v555, %v556
        %v558 = vrot.slane %v557, 2
        %v559 = vmax.f32 %v557, %v558
        %v560 = vrot.slane %v559, 1
        %v561 = vmax.f32 %v559, %v560
        %v562 = vsub.f32 %v551, %v561
        %v563 = vmul.f32 %v562, 1.442695
        %v564 = vpow.pop %v563
        %v565 = vsel %vm554, %v564, 0.0
        %v566 = vrot.slane %v565, 4
        %v567 = vadd.f32 %v565, %v566
        %v568 = vrot.slane %v567, 2
        %v569 = vadd.f32 %v567, %v568
        %v570 = vrot.slane %v569, 1
        %v571 = vadd.f32 %v569, %v570
        %v572 = vrcp.pop %v571
        %v573 = vmul.f32 %v564, %v572
        %574 = vst [vmem:[%s173] sm:$0xf] %v573
        %s575 = sand.u32 %s75, 1
        %s576 = scalar_lea.sflag [#allocation4], %s575
        %s577 = sand.u32 %s75, 1
        %s578 = smul.addr %s577, 4
        %s579 = scalar_lea.vmem [#allocation7], %s578
        // Predicated region
        $region37: #{tpu_custom_call.1} parent=27 // pred_check
          %p580 = pneg %p85
        $region38: #{tpu_custom_call.1} parent=27 // pred_check_branch
          %582 = sbr.rel (%p580) target = $region40
        $region39: #{tpu_custom_call.1} parent=27 // pred_region
          %s584 = ssub.s32 64, 64
          %585 = vsyncadd %s576, %s584
          %s586 = smul.addr %s20, 64
          %s587 = scalar_lea.hbm %s2, %s586
          %s589 = sshll.u32 %s579, 4
          %s590 = int_to_ptr.vmem [resolvable:$true] %s589
          %592 = dma.vmem_to_hbm [thread:$0]  %s590, 64, %s587, %s576
        $region40: #{tpu_custom_call.1} parent=27 // pred_fallthru
          _
      $region28: #{tpu_custom_call.1} parent=5 // pred_fallthru
        _
      %p593 = scmp.le.s32.totalorder 2, %s15
      // Predicated region
      $region41: #{tpu_custom_call.1} parent=5 // pred_check
        %p594 = pneg %p593
      $region42: #{tpu_custom_call.1} parent=5 // pred_check_branch
        %596 = sbr.rel (%p594) target = $region44
      $region43: #{tpu_custom_call.1} parent=5 // pred_region
        %s597 = ssub.s32 %s15, 2
        // Predicated region
        $region45: #{tpu_custom_call.1} parent=43 // pred_check
          %p598 = pneg %p91
        $region46: #{tpu_custom_call.1} parent=43 // pred_check_branch
          %600 = sbr.rel (%p598) target = $region48
        $region47: #{tpu_custom_call.1} parent=43 // pred_region
          %s601 = sand.u32 %s76, 1
          %s602 = scalar_lea.sflag [#allocation4], %s601
          %s603 = sand.u32 %s76, 1
          %s604 = smul.addr %s603, 4
          %s605 = scalar_lea.vmem [#allocation7], %s604
          %606 = dma.done %s602, 64
        $region48: #{tpu_custom_call.1} parent=43 // pred_fallthru
          _
      $region44: #{tpu_custom_call.1} parent=5 // pred_fallthru
        _
    $region6: #{tpu_custom_call.1} parent=1 // loop_footer
      %s19 = sadd.s32 1, %s15
    $region7: #{tpu_custom_call.1} parent=1 // loop_footer_branch
      %14 = sbr.rel target = $region3
    $region8: #{tpu_custom_call.1} parent=1 // loop_exit
      _
    %607 = vsyncpa [#allocation3], 1
    %s608 = scalar_lea.sflag [#allocation3], 1
    %609 = vsyncpa %s608, 1
    %610 = vsyncpa [#allocation6], 1
    %611 = vsyncpa [#allocation4], 1
    %s612 = scalar_lea.sflag [#allocation4], 1
    %613 = vsyncpa %s612, 1

</llo_original>
